<compile_context>
chip_gen: v5e
topology: v5e:2x2
jax: 0.10.0
libtpu: 0.0.40
codegen_flags: <defaults>
</compile_context>

<pallas_src>
import functools

import jax
import jax.numpy as jnp
from jax import lax
from jax.experimental import pallas as pl
from jax.experimental.pallas import tpu as pltpu


def _round_up(a, b):
    return (a + b - 1) // b * b


def _vmem_need(tm, tn, d, itemsize, n_pad):
    """Rough per-step VMEM working set (double-buffered tiles + scratch)."""
    lw = 128 if tn % 128 == 0 else tn
    g_j = max(1, n_pad // tn)
    return (2 * tm * d * itemsize                      # row feature tile (x2 buffers)
            + 2 * tn * d * itemsize                    # column feature tile (x2 buffers)
            + 2 * tm * lw * 4                          # lane-wise max/min accumulators
            + 2 * 2 * _round_up(g_j, 8) * tn * 4       # resident col labels / norms
            + 4 * tm * 4                               # row labels / norms
            + 2 * 8 * 128 * 4)                         # output block


def _tuplet_kernel(x_row_ref, xt_col_ref, t_row_ref, t_col_ref,
                   sq_row_ref, sqh_col_ref, out_ref,
                   max_acc, min_acc, *, n, tm, tn, lw, margin):
    i = pl.program_id(0)
    j = pl.program_id(1)

    # ---- init lane-wise running max/min of the shifted squared distance -----
    @pl.when(j == 0)
    def _():
        max_acc[...] = jnp.full((tm, lw), -jnp.inf, jnp.float32)
        min_acc[...] = jnp.full((tm, lw), jnp.inf, jnp.float32)

    # Gram tile on the MXU in canonical (tm,d) x (d,tn) form (column copy of x is
    # pre-transposed in the wrapper, so no in-kernel transpose can be emitted).
    gram = jnp.dot(x_row_ref[...], xt_col_ref[...],
                   preferred_element_type=jnp.float32)            # (tm, tn) f32

    # Column labels / halved norms are fully VMEM-resident; dynamic sublane slice.
    t_col = t_col_ref[pl.ds(j, 1), :]                             # (1, tn) int32
    sqh_col = sqh_col_ref[pl.ds(j, 1), :]                         # (1, tn) f32

    # Shifted/scaled squared distance surrogate:  part = 0.5*||x_j||^2 - <x_i,x_j>.
    # dist^2 = 2*part + ||x_i||^2 is a monotone map of part, so arg-max/min are
    # preserved and the x2 / +sq_i are applied only to the reduced vectors below.
    # Padded columns carry a 1e30 sentinel in sqh_col and a -1 label, so no
    # per-element column mask is needed.
    part = sqh_col - gram                                         # (tm, tn)

    mask = t_row_ref[...] == t_col                                # (tm, tn) bool
    pos = jnp.where(mask, part, -jnp.inf)
    neg = jnp.where(mask, jnp.inf, part)

    # Lane-wise (VALU) accumulation; the only cross-lane (XLU) reduce happens
    # once per row block in the finalize.
    mx = max_acc[...]
    mn = min_acc[...]
    for c in range(tn // lw):                                     # static, 1-2 chunks
        sl = slice(c * lw, (c + 1) * lw)
        mx = jnp.maximum(mx, pos[:, sl])
        mn = jnp.minimum(mn, neg[:, sl])
    max_acc[...] = mx
    min_acc[...] = mn

    # ---- finalize: sqrt on reduced vectors only, emit lane-dense partial sums --
    @pl.when(j == pl.num_programs(1) - 1)
    def _():
        sq_i = sq_row_ref[...]                                    # (tm, 1) f32
        ap2 = 2.0 * jnp.max(max_acc[...], axis=1, keepdims=True) + sq_i
        an2 = 2.0 * jnp.min(min_acc[...], axis=1, keepdims=True) + sq_i
        dist_ap = jnp.sqrt(jnp.maximum(ap2, 1e-12))
        dist_an = jnp.sqrt(jnp.maximum(an2, 1e-12))

        row_ok = (i * tm + lax.broadcasted_iota(jnp.int32, (tm, 1), 0)) < n
        rowf = row_ok.astype(jnp.float32)

        pos_sum = jnp.sum(rowf * dist_ap)
        neg_sum = jnp.sum(rowf * jnp.maximum(0.0, margin - dist_an))
        prec_cnt = jnp.sum(rowf * ((dist_ap < margin).astype(jnp.float32)
                                   + (dist_an >= margin).astype(jnp.float32)))

        # Lane-dense (1, 8, 128) partial block: lane0=pos, lane1=neg, lane2=prec.
        lane = lax.broadcasted_iota(jnp.int32, (1, 8, 128), 2)
        out = jnp.where(lane == 0, pos_sum,
              jnp.where(lane == 1, neg_sum,
              jnp.where(lane == 2, prec_cnt, 0.0)))
        out_ref[...] = out


def tuplet_loss(inputs, targets, margin=0.0, *, use_bf16_gram=False):
    """inputs: (N, D) float (f32 or bf16); targets: (N,) int labels.
    Returns (loss, prec) matching TupletLoss(margin, loss='hinge').forward."""
    n, d = inputs.shape
    x = inputs
    if use_bf16_gram and x.dtype == jnp.float32:
        x = x.astype(jnp.bfloat16)            # MXU-native; sq stays f32 below
    itemsize = jnp.dtype(x.dtype).itemsize
    sub = 16 if itemsize < 4 else 8           # bf16 packs 16 sublanes per vreg

    budget = 40 << 20                         # tile budget; fits v7x's 64 MiB VMEM
    if n <= 256:
        n_pad = _round_up(n, sub)
        tm = tn = n_pad
    else:
        tn = 256
        tm = 256
        for cand in (1024, 512):              # larger tm => fewer passes over x,
            np_c = _round_up(n, cand)         # but keep >=2 row blocks (megacore)
            if np_c // cand >= 2 and _vmem_need(cand, tn, d, itemsize, np_c) <= budget:
                tm = cand
                break
        n_pad = _round_up(n, max(tm, tn))
    lw = 128 if tn % 128 == 0 else tn
    g_i, g_j = n_pad // tm, n_pad // tn

    t = targets.reshape(-1).astype(jnp.int32)
    xf = inputs.astype(jnp.float32)
    sq = jnp.sum(xf * xf, axis=1)             # (n,) f32 squared norms
    if n_pad != n:
        pad = n_pad - n
        x = jnp.pad(x, ((0, pad), (0, 0)))
        t = jnp.pad(t, (0, pad), constant_values=-1)        # never matches a real id
        sq_row = jnp.pad(sq, (0, pad))
        # Large FINITE sentinel (not +inf): padded columns can never win the
        # negative min, and padded rows are zeroed by rowf in the finalize.
        sqh_col = jnp.pad(0.5 * sq, (0, pad), constant_values=1e30)
    else:
        sq_row = sq
        sqh_col = 0.5 * sq

    xt = x.T                                  # (d, n_pad): canonical MXU rhs
    t_row = t.reshape(n_pad, 1)
    sq_row = sq_row.reshape(n_pad, 1)
    t_col = t.reshape(g_j, tn)                # VMEM-resident, sliced per grid step
    sqh_col = sqh_col.reshape(g_j, tn)

    kernel = functools.partial(_tuplet_kernel, n=n, tm=tm, tn=tn, lw=lw,
                               margin=float(margin))
    vmem_need = _vmem_need(tm, tn, d, itemsize, n_pad)
    vmem_limit = int(min(max(vmem_need + (8 << 20), 32 << 20), 48 << 20))

    parts = pl.pallas_call(
        kernel,
        out_shape=jax.ShapeDtypeStruct((g_i, 8, 128), jnp.float32),
        grid=(g_i, g_j),
        in_specs=[
            pl.BlockSpec((tm, d), lambda i, j: (i, 0)),      # row feature tile
            pl.BlockSpec((d, tn), lambda i, j: (0, j)),      # column feature tile (x^T)
            pl.BlockSpec((tm, 1), lambda i, j: (i, 0)),      # row labels
            pl.BlockSpec((g_j, tn), lambda i, j: (0, 0)),    # all column labels (resident)
            pl.BlockSpec((tm, 1), lambda i, j: (i, 0)),      # row squared norms
            pl.BlockSpec((g_j, tn), lambda i, j: (0, 0)),    # 0.5*col norms / sentinel (resident)
        ],
        out_specs=pl.BlockSpec((1, 8, 128), lambda i, j: (i, 0, 0)),
        scratch_shapes=[
            pltpu.VMEM((tm, lw), jnp.float32),               # lane-wise running max
            pltpu.VMEM((tm, lw), jnp.float32),               # lane-wise running min
        ],
        compiler_params=pltpu.CompilerParams(
            dimension_semantics=("parallel", "arbitrary"),
            vmem_limit_bytes=vmem_limit),
        cost_estimate=pl.CostEstimate(
            flops=2 * n_pad * n_pad * d + 6 * n_pad * n_pad,
            transcendentals=2 * n_pad,
            bytes_accessed=(g_i + 1) * n_pad * d * itemsize + 16 * n_pad),
    )(x, xt, t_row, t_col, sq_row, sqh_col)

    pos = jnp.sum(parts[:, 0, 0])
    neg = jnp.sum(parts[:, 0, 1])
    cnt = jnp.sum(parts[:, 0, 2])
    two_n = jnp.float32(2 * n)
    return (pos + neg) / two_n, cnt / two_n


def _tuplet_loss_ref(inputs, targets, margin=0.0):
    """Pure-JAX reference mirroring the PyTorch module."""
    x = inputs.astype(jnp.float32)
    n = x.shape[0]
    sq = jnp.sum(x * x, axis=1, keepdims=True)
    dist = jnp.sqrt(jnp.maximum(sq + sq.T - 2.0 * x @ x.T, 1e-12))
    t = targets.reshape(n, 1)
    mask = t == t.T
    dist_ap = jnp.max(jnp.where(mask, dist, -jnp.inf), axis=1)
    dist_an = jnp.min(jnp.where(mask, jnp.inf, dist), axis=1)
    loss = (jnp.sum(dist_ap) + jnp.sum(jnp.maximum(0.0, margin - dist_an))) / (2.0 * n)
    prec = (jnp.sum(dist_ap < margin) + jnp.sum(~(dist_an < margin))) / (2.0 * n)
    return loss, prec


if __name__ == "__main__":
    key = jax.random.PRNGKey(0)
    k1, k2 = jax.random.split(key)

    # Small case: 4 identities x 2 samples each -> single-tile grid (1, 1).
    n, d = 8, 32
    inputs = jax.random.normal(k1, (n, d), dtype=jnp.float32)
    targets = jnp.array([0, 0, 1, 1, 2, 2, 3, 3], dtype=jnp.int32)
    loss, prec = tuplet_loss(inputs, targets, margin=0.0)
    jax.block_until_ready((loss, prec))
    loss_ref, prec_ref = _tuplet_loss_ref(inputs, targets, margin=0.0)
    assert jnp.allclose(loss, loss_ref, atol=1e-5, rtol=1e-5), (loss, loss_ref)
    assert jnp.allclose(prec, jnp.float32(prec_ref), atol=1e-6), (prec, prec_ref)

    # Larger, non-multiple batch: exercises the tiled (2, 2) grid, the online
    # lane-wise max/min accumulators, the resident column labels/norms and the
    # sentinel-based row/column padding.
    n2, d2 = 300, 32
    inputs2 = jax.random.normal(k2, (n2, d2), dtype=jnp.float32)
    targets2 = jnp.arange(n2, dtype=jnp.int32) % 30           # 30 ids x 10 samples
    loss2, prec2 = tuplet_loss(inputs2, targets2, margin=1.0)
    jax.block_until_ready((loss2, prec2))
    loss2_ref, prec2_ref = _tuplet_loss_ref(inputs2, targets2, margin=1.0)
    assert jnp.allclose(loss2, loss2_ref, atol=1e-4, rtol=1e-4), (loss2, loss2_ref)
    assert jnp.allclose(prec2, jnp.float32(prec2_ref), atol=1e-6), (prec2, prec2_ref)

    # Optional bf16-Gram fast path (looser tolerance; MXU bf16-native).
    loss3, _ = tuplet_loss(inputs2, targets2, margin=1.0, use_bf16_gram=True)
    jax.block_until_ready(loss3)
    assert jnp.allclose(loss3, loss2_ref, atol=5e-2, rtol=5e-2), (loss3, loss2_ref)

    print("KERNEL_OK")
</pallas_src>

<mosaic_0001>
module attributes {stable_mosaic.version = 11 : i64} {
  func.func @_tuplet_kernel(%arg0: i32, %arg1: i32, %arg2: memref<8x32xf32, #tpu.memory_space<vmem>>, %arg3: memref<32x8xf32, #tpu.memory_space<vmem>>, %arg4: memref<8x1xi32, #tpu.memory_space<vmem>>, %arg5: memref<1x8xi32, #tpu.memory_space<vmem>>, %arg6: memref<8x1xf32, #tpu.memory_space<vmem>>, %arg7: memref<1x8xf32, #tpu.memory_space<vmem>>, %arg8: memref<1x8x128xf32, #tpu.memory_space<vmem>>, %arg9: memref<8x8xf32, #tpu.memory_space<vmem>>, %arg10: memref<8x8xf32, #tpu.memory_space<vmem>>) attributes {dimension_semantics = [#tpu.dimension_semantics<parallel>, #tpu.dimension_semantics<arbitrary>], iteration_bounds = array<i64: 1, 1>, scalar_prefetch = 0 : i64, scratch_operands = 2 : i64, tpu.core_type = #tpu.core_type<tc>, window_params = [{transform_indices = @transform_0, window_bounds = array<i64: 8, 32>}, {transform_indices = @transform_1, window_bounds = array<i64: 32, 8>}, {transform_indices = @transform_2, window_bounds = array<i64: 8, 1>}, {pipeline_mode = #tpu.pipeline_mode<synchronous>, transform_indices = @transform_3, window_bounds = array<i64: 1, 8>}, {transform_indices = @transform_4, window_bounds = array<i64: 8, 1>}, {pipeline_mode = #tpu.pipeline_mode<synchronous>, transform_indices = @transform_5, window_bounds = array<i64: 1, 8>}, {transform_indices = @transform_6, window_bounds = array<i64: 1, 8, 128>}]} {
    %c0_i32 = arith.constant 0 : i32
    %0 = arith.cmpi eq, %arg1, %c0_i32 : i32
    %1 = arith.extui %0 : i1 to i32
    %c0_i32_0 = arith.constant 0 : i32
    %2 = arith.cmpi ne, %1, %c0_i32_0 : i32
    scf.if %2 {
      %cst_20 = arith.constant 0xFF800000 : f32
      %29 = vector.broadcast %cst_20 : f32 to vector<8x8xf32>
      %c0_21 = arith.constant 0 : index
      %c0_22 = arith.constant 0 : index
      %30 = vector.load %arg9[%c0_21, %c0_22] : memref<8x8xf32, #tpu.memory_space<vmem>>, vector<8x8xf32>
      tpu.vector_store %arg9[%c0_21, %c0_22], %29 {strides = array<i32>} : memref<8x8xf32, #tpu.memory_space<vmem>>, vector<8x8xf32>,
      %cst_23 = arith.constant 0x7F800000 : f32
      %31 = vector.broadcast %cst_23 : f32 to vector<8x8xf32>
      %c0_24 = arith.constant 0 : index
      %c0_25 = arith.constant 0 : index
      %32 = vector.load %arg10[%c0_24, %c0_25] : memref<8x8xf32, #tpu.memory_space<vmem>>, vector<8x8xf32>
      tpu.vector_store %arg10[%c0_24, %c0_25], %31 {strides = array<i32>} : memref<8x8xf32, #tpu.memory_space<vmem>>, vector<8x8xf32>,
    } else {
    }
    %c0 = arith.constant 0 : index
    %c0_1 = arith.constant 0 : index
    %3 = vector.load %arg2[%c0, %c0_1] : memref<8x32xf32, #tpu.memory_space<vmem>>, vector<8x32xf32>
    %c0_2 = arith.constant 0 : index
    %c0_3 = arith.constant 0 : index
    %4 = vector.load %arg3[%c0_2, %c0_3] : memref<32x8xf32, #tpu.memory_space<vmem>>, vector<32x8xf32>
    %cst = arith.constant dense<0.000000e+00> : vector<8x8xf32>
    %5 = tpu.matmul %3, %4, %cst {dimension_numbers = #tpu.dot_dimension_numbers<[1], [0], [0], [1], [0, 0, 1, 1], [], []>} : vector<8x32xf32>, vector<32x8xf32>, vector<8x8xf32> -> vector<8x8xf32>
    %6 = arith.index_cast %arg1 : i32 to index
    %c0_4 = arith.constant 0 : index
    %7 = vector.load %arg5[%6, %c0_4] : memref<1x8xi32, #tpu.memory_space<vmem>>, vector<1x8xi32>
    %8 = arith.index_cast %arg1 : i32 to index
    %c0_5 = arith.constant 0 : index
    %9 = vector.load %arg7[%8, %c0_5] : memref<1x8xf32, #tpu.memory_space<vmem>>, vector<1x8xf32>
    %10 = vector.broadcast %9 : vector<1x8xf32> to vector<8x8xf32>
    %11 = arith.subf %10, %5 : vector<8x8xf32>
    %c0_6 = arith.constant 0 : index
    %c0_7 = arith.constant 0 : index
    %12 = vector.load %arg4[%c0_6, %c0_7] : memref<8x1xi32, #tpu.memory_space<vmem>>, vector<8x1xi32>
    %13 = vector.broadcast %12 : vector<8x1xi32> to vector<8x8xi32>
    %14 = vector.broadcast %7 : vector<1x8xi32> to vector<8x8xi32>
    %15 = arith.cmpi eq, %13, %14 : vector<8x8xi32>
    %cst_8 = arith.constant 0xFF800000 : f32
    %16 = vector.broadcast %cst_8 : f32 to vector<8x8xf32>
    %17 = arith.select %15, %11, %16 : vector<8x8xi1>, vector<8x8xf32>
    %cst_9 = arith.constant 0x7F800000 : f32
    %18 = vector.broadcast %cst_9 : f32 to vector<8x8xf32>
    %19 = arith.select %15, %18, %11 : vector<8x8xi1>, vector<8x8xf32>
    %c0_10 = arith.constant 0 : index
    %c0_11 = arith.constant 0 : index
    %20 = vector.load %arg9[%c0_10, %c0_11] : memref<8x8xf32, #tpu.memory_space<vmem>>, vector<8x8xf32>
    %c0_12 = arith.constant 0 : index
    %c0_13 = arith.constant 0 : index
    %21 = vector.load %arg10[%c0_12, %c0_13] : memref<8x8xf32, #tpu.memory_space<vmem>>, vector<8x8xf32>
    %22 = arith.maximumf %20, %17 : vector<8x8xf32>
    %23 = arith.minimumf %21, %19 : vector<8x8xf32>
    %c0_14 = arith.constant 0 : index
    %c0_15 = arith.constant 0 : index
    %24 = vector.load %arg9[%c0_14, %c0_15] : memref<8x8xf32, #tpu.memory_space<vmem>>, vector<8x8xf32>
    tpu.vector_store %arg9[%c0_14, %c0_15], %22 {strides = array<i32>} : memref<8x8xf32, #tpu.memory_space<vmem>>, vector<8x8xf32>,
    %c0_16 = arith.constant 0 : index
    %c0_17 = arith.constant 0 : index
    %25 = vector.load %arg10[%c0_16, %c0_17] : memref<8x8xf32, #tpu.memory_space<vmem>>, vector<8x8xf32>
    tpu.vector_store %arg10[%c0_16, %c0_17], %23 {strides = array<i32>} : memref<8x8xf32, #tpu.memory_space<vmem>>, vector<8x8xf32>,
    %c0_i32_18 = arith.constant 0 : i32
    %26 = arith.cmpi eq, %arg1, %c0_i32_18 : i32
    %27 = arith.extui %26 : i1 to i32
    %c0_i32_19 = arith.constant 0 : i32
    %28 = arith.cmpi ne, %27, %c0_i32_19 : i32
    scf.if %28 {
      %c0_20 = arith.constant 0 : index
      %c0_21 = arith.constant 0 : index
      %29 = vector.load %arg6[%c0_20, %c0_21] : memref<8x1xf32, #tpu.memory_space<vmem>>, vector<8x1xf32>
      %c0_22 = arith.constant 0 : index
      %c0_23 = arith.constant 0 : index
      %30 = vector.load %arg9[%c0_22, %c0_23] : memref<8x8xf32, #tpu.memory_space<vmem>>, vector<8x8xf32>
      %cst_24 = arith.constant dense<0xFF800000> : vector<8xf32>
      %31 = vector.multi_reduction <maximumf>, %30, %cst_24 [1] : vector<8x8xf32> to vector<8xf32>
      %32 = vector.shape_cast %31 : vector<8xf32> to vector<8x1xf32>
      %cst_25 = arith.constant 2.000000e+00 : f32
      %33 = vector.broadcast %cst_25 : f32 to vector<8x1xf32>
      %34 = arith.mulf %33, %32 : vector<8x1xf32>
      %35 = arith.addf %34, %29 : vector<8x1xf32>
      %c0_26 = arith.constant 0 : index
      %c0_27 = arith.constant 0 : index
      %36 = vector.load %arg10[%c0_26, %c0_27] : memref<8x8xf32, #tpu.memory_space<vmem>>, vector<8x8xf32>
      %cst_28 = arith.constant dense<0x7F800000> : vector<8xf32>
      %37 = vector.multi_reduction <minimumf>, %36, %cst_28 [1] : vector<8x8xf32> to vector<8xf32>
      %38 = vector.shape_cast %37 : vector<8xf32> to vector<8x1xf32>
      %cst_29 = arith.constant 2.000000e+00 : f32
      %39 = vector.broadcast %cst_29 : f32 to vector<8x1xf32>
      %40 = arith.mulf %39, %38 : vector<8x1xf32>
      %41 = arith.addf %40, %29 : vector<8x1xf32>
      %cst_30 = arith.constant 9.99999996E-13 : f32
      %42 = vector.broadcast %cst_30 : f32 to vector<8x1xf32>
      %43 = arith.maximumf %35, %42 : vector<8x1xf32>
      %44 = math.sqrt %43 : vector<8x1xf32>
      %cst_31 = arith.constant 9.99999996E-13 : f32
      %45 = vector.broadcast %cst_31 : f32 to vector<8x1xf32>
      %46 = arith.maximumf %41, %45 : vector<8x1xf32>
      %47 = math.sqrt %46 : vector<8x1xf32>
      %c8_i32 = arith.constant 8 : i32
      %48 = arith.muli %arg0, %c8_i32 : i32
      %49 = tpu.iota {dimensions = array<i32: 0>} : vector<8x1xi32>
      %50 = vector.broadcast %48 : i32 to vector<8x1xi32>
      %51 = arith.addi %50, %49 : vector<8x1xi32>
      %c8_i32_32 = arith.constant 8 : i32
      %52 = vector.broadcast %c8_i32_32 : i32 to vector<8x1xi32>
      %53 = arith.cmpi slt, %51, %52 : vector<8x1xi32>
      %54 = arith.extui %53 : vector<8x1xi1> to vector<8x1xi32>
      %55 = arith.sitofp %54 : vector<8x1xi32> to vector<8x1xf32>
      %56 = arith.mulf %55, %44 : vector<8x1xf32>
      %57 = vector.shape_cast %56 : vector<8x1xf32> to vector<1x8x1xf32>
      %cst_33 = arith.constant dense<0.000000e+00> : vector<1xf32>
      %58 = vector.multi_reduction <add>, %57, %cst_33 [1, 2] : vector<1x8x1xf32> to vector<1xf32>
      %59 = vector.shape_cast %58 : vector<1xf32> to vector<1x1x1xf32>
      %60 = vector.extract %59[0, 0, 0] : f32 from vector<1x1x1xf32>
      %cst_34 = arith.constant 0.000000e+00 : f32
      %61 = vector.broadcast %cst_34 : f32 to vector<8x1xf32>
      %62 = arith.subf %61, %47 : vector<8x1xf32>
      %cst_35 = arith.constant 0.000000e+00 : f32
      %63 = vector.broadcast %cst_35 : f32 to vector<8x1xf32>
      %64 = arith.maximumf %63, %62 : vector<8x1xf32>
      %65 = arith.mulf %55, %64 : vector<8x1xf32>
      %66 = vector.shape_cast %65 : vector<8x1xf32> to vector<1x8x1xf32>
      %cst_36 = arith.constant dense<0.000000e+00> : vector<1xf32>
      %67 = vector.multi_reduction <add>, %66, %cst_36 [1, 2] : vector<1x8x1xf32> to vector<1xf32>
      %68 = vector.shape_cast %67 : vector<1xf32> to vector<1x1x1xf32>
      %69 = vector.extract %68[0, 0, 0] : f32 from vector<1x1x1xf32>
      %cst_37 = arith.constant 0.000000e+00 : f32
      %70 = vector.broadcast %cst_37 : f32 to vector<8x1xf32>
      %71 = arith.cmpf olt, %44, %70 : vector<8x1xf32>
      %72 = arith.extui %71 : vector<8x1xi1> to vector<8x1xi32>
      %73 = arith.sitofp %72 : vector<8x1xi32> to vector<8x1xf32>
      %cst_38 = arith.constant 0.000000e+00 : f32
      %74 = vector.broadcast %cst_38 : f32 to vector<8x1xf32>
      %75 = arith.cmpf oge, %47, %74 : vector<8x1xf32>
      %76 = arith.extui %75 : vector<8x1xi1> to vector<8x1xi32>
      %77 = arith.sitofp %76 : vector<8x1xi32> to vector<8x1xf32>
      %78 = arith.addf %73, %77 : vector<8x1xf32>
      %79 = arith.mulf %55, %78 : vector<8x1xf32>
      %80 = vector.shape_cast %79 : vector<8x1xf32> to vector<1x8x1xf32>
      %cst_39 = arith.constant dense<0.000000e+00> : vector<1xf32>
      %81 = vector.multi_reduction <add>, %80, %cst_39 [1, 2] : vector<1x8x1xf32> to vector<1xf32>
      %82 = vector.shape_cast %81 : vector<1xf32> to vector<1x1x1xf32>
      %83 = vector.extract %82[0, 0, 0] : f32 from vector<1x1x1xf32>
      %84 = tpu.iota {dimensions = array<i32: 2>} : vector<1x8x128xi32>
      %c0_i32_40 = arith.constant 0 : i32
      %85 = vector.broadcast %c0_i32_40 : i32 to vector<1x8x128xi32>
      %86 = arith.cmpi eq, %84, %85 : vector<1x8x128xi32>
      %c1_i32 = arith.constant 1 : i32
      %87 = vector.broadcast %c1_i32 : i32 to vector<1x8x128xi32>
      %88 = arith.cmpi eq, %84, %87 : vector<1x8x128xi32>
      %c2_i32 = arith.constant 2 : i32
      %89 = vector.broadcast %c2_i32 : i32 to vector<1x8x128xi32>
      %90 = arith.cmpi eq, %84, %89 : vector<1x8x128xi32>
      %cst_41 = arith.constant 0.000000e+00 : f32
      %91 = vector.broadcast %83 : f32 to vector<1x8x128xf32>
      %92 = vector.broadcast %cst_41 : f32 to vector<1x8x128xf32>
      %93 = arith.select %90, %91, %92 : vector<1x8x128xi1>, vector<1x8x128xf32>
      %94 = vector.broadcast %69 : f32 to vector<1x8x128xf32>
      %95 = arith.select %88, %94, %93 : vector<1x8x128xi1>, vector<1x8x128xf32>
      %96 = vector.broadcast %60 : f32 to vector<1x8x128xf32>
      %97 = arith.select %86, %96, %95 : vector<1x8x128xi1>, vector<1x8x128xf32>
      %c0_42 = arith.constant 0 : index
      %c0_43 = arith.constant 0 : index
      %c0_44 = arith.constant 0 : index
      %98 = vector.load %arg8[%c0_42, %c0_43, %c0_44] : memref<1x8x128xf32, #tpu.memory_space<vmem>>, vector<1x8x128xf32>
      tpu.vector_store %arg8[%c0_42, %c0_43, %c0_44], %97 {strides = array<i32>} : memref<1x8x128xf32, #tpu.memory_space<vmem>>, vector<1x8x128xf32>,
    } else {
    }
    return
  }
  func.func @transform_0(%arg0: i32, %arg1: i32) -> (i32, i32) {
    %c0_i32 = arith.constant 0 : i32
    %c0_i32_0 = arith.constant 0 : i32
    return %arg0, %c0_i32 : i32, i32
  }
  func.func @transform_1(%arg0: i32, %arg1: i32) -> (i32, i32) {
    %c0_i32 = arith.constant 0 : i32
    %c0_i32_0 = arith.constant 0 : i32
    return %c0_i32, %arg1 : i32, i32
  }
  func.func @transform_2(%arg0: i32, %arg1: i32) -> (i32, i32) {
    %c0_i32 = arith.constant 0 : i32
    %c0_i32_0 = arith.constant 0 : i32
    return %arg0, %c0_i32 : i32, i32
  }
  func.func @transform_3(%arg0: i32, %arg1: i32) -> (i32, i32) {
    %c0_i32 = arith.constant 0 : i32
    %c0_i32_0 = arith.constant 0 : i32
    %c0_i32_1 = arith.constant 0 : i32
    return %c0_i32, %c0_i32_0 : i32, i32
  }
  func.func @transform_4(%arg0: i32, %arg1: i32) -> (i32, i32) {
    %c0_i32 = arith.constant 0 : i32
    %c0_i32_0 = arith.constant 0 : i32
    return %arg0, %c0_i32 : i32, i32
  }
  func.func @transform_5(%arg0: i32, %arg1: i32) -> (i32, i32) {
    %c0_i32 = arith.constant 0 : i32
    %c0_i32_0 = arith.constant 0 : i32
    %c0_i32_1 = arith.constant 0 : i32
    return %c0_i32, %c0_i32_0 : i32, i32
  }
  func.func @transform_6(%arg0: i32, %arg1: i32) -> (i32, i32, i32) {
    %c0_i32 = arith.constant 0 : i32
    %c0_i32_0 = arith.constant 0 : i32
    %c0_i32_1 = arith.constant 0 : i32
    return %arg0, %c0_i32, %c0_i32_0 : i32, i32, i32
  }
}

</mosaic_0001>

<llo_original>
// kernel: tpu_custom_call.1
$region0: #{tpu_custom_call.1}
  #allocation0 [shape = 'u32[]', space=smem, size = 0x4, offset = 0x4, fixed_abs, tag = 'smem constant byte address 0x4 - core index']
  #allocation1 [shape = 'u32[72,128]{1,0:T(1,128)}', space=vmem, size = 0x9000, scoped, tag = 'internal scratch']
  #allocation2 [shape = 'f32[8,8]{1,0:T(8,128)}', space=vmem, size = 0x1000, scoped, tag = 'scratch operand']
  #allocation3 [shape = 'f32[8,8]{1,0:T(8,128)}', space=vmem, size = 0x1000, scoped, tag = 'scratch operand']
  %s0 = inlined_call_operand.vmem [shape: f32[8,32], index: 0, kind: input, shape index: {}]
  %s1 = inlined_call_operand.vmem [shape: f32[32,8], index: 1, kind: input, shape index: {}]
  %s2 = inlined_call_operand.vmem [shape: s32[8,1], index: 2, kind: input, shape index: {}]
  %s3 = inlined_call_operand.vmem [shape: s32[1,8], index: 3, kind: input, shape index: {}]
  %s4 = inlined_call_operand.vmem [shape: f32[8,1], index: 4, kind: input, shape index: {}]
  %s5 = inlined_call_operand.vmem [shape: f32[1,8], index: 5, kind: input, shape index: {}]
  %s6 = inlined_call_operand.hbm [shape: f32[1,8,128], index: 6, kind: output, shape index: {}]
  %s7 = sld [smem:[#allocation0]]
  $region42: #{tpu_custom_call.1} parent=0
    _
  %s9 = ssub.s32 1, %s7
  %s10 = scalar_select 0, %s9, %s7
  $region1: #{tpu_custom_call.1} parent=0
    #allocation4 [shape = 'u8[4096]{0}', space=vmem, size = 0x1000, scoped, tag = 'output window, operand 0, single buffered']
    #allocation5 [shape = 's32[1]{0}', space=sflag, size = 0x4, scoped, tag = 'scoped memory for tpu_custom_call.1']
    %11 = vsyncpa [#allocation5], 0
    // Predicated region
    $region2: #{tpu_custom_call.1} parent=1 // pred_check
      _
    $region3: #{tpu_custom_call.1} parent=1 // pred_check_branch
      %13 = sbr.rel (0) target = $region5
    $region4: #{tpu_custom_call.1} parent=1 // pred_region
      _
    $region5: #{tpu_custom_call.1} parent=1 // pred_fallthru
      _
    // Predicated region
    $region6: #{tpu_custom_call.1} parent=1 // pred_check
      _
    $region7: #{tpu_custom_call.1} parent=1 // pred_check_branch
      %15 = sbr.rel (0) target = $region9
    $region8: #{tpu_custom_call.1} parent=1 // pred_region
      _
    $region9: #{tpu_custom_call.1} parent=1 // pred_fallthru
      _
    // Predicated region
    $region10: #{tpu_custom_call.1} parent=1 // pred_check
      _
    $region11: #{tpu_custom_call.1} parent=1 // pred_check_branch
      %17 = sbr.rel (0) target = $region13
    $region12: #{tpu_custom_call.1} parent=1 // pred_region
      _
    $region13: #{tpu_custom_call.1} parent=1 // pred_fallthru
      _
    // Predicated region
    $region14: #{tpu_custom_call.1} parent=1 // pred_check
      _
    $region15: #{tpu_custom_call.1} parent=1 // pred_check_branch
      %19 = sbr.rel (0) target = $region17
    $region16: #{tpu_custom_call.1} parent=1 // pred_region
      _
    $region17: #{tpu_custom_call.1} parent=1 // pred_fallthru
      _
    // Predicated region
    $region18: #{tpu_custom_call.1} parent=1 // pred_check
      _
    $region19: #{tpu_custom_call.1} parent=1 // pred_check_branch
      %21 = sbr.rel (0) target = $region21
    $region20: #{tpu_custom_call.1} parent=1 // pred_region
      _
    $region21: #{tpu_custom_call.1} parent=1 // pred_fallthru
      _
    // Predicated region
    $region22: #{tpu_custom_call.1} parent=1 // pred_check
      _
    $region23: #{tpu_custom_call.1} parent=1 // pred_check_branch
      %23 = sbr.rel (0) target = $region25
    $region24: #{tpu_custom_call.1} parent=1 // pred_region
      _
    $region25: #{tpu_custom_call.1} parent=1 // pred_fallthru
      _
    %p24 = scmp.eq.s32.totalorder 0, 0
    // Predicated region
    $region26: #{tpu_custom_call.1} parent=1 // pred_check
      %p25 = pneg %p24
    $region27: #{tpu_custom_call.1} parent=1 // pred_check_branch
      %27 = sbr.rel (%p25) target = $region29
    $region28: #{tpu_custom_call.1} parent=1 // pred_region
      %vm28 = vcmask 64512
      %29 = vst.msk [vmem:[#allocation2] sm:$0xff] %vm28, -inf
      %30 = vst.msk [vmem:[#allocation3] sm:$0xff] %vm28, inf
    $region29: #{tpu_custom_call.1} parent=1 // pred_fallthru
      _
    %v31 = vld [vmem:[%s0] sm:$0xff]
    %v32 = vld [vmem:[%s1] sm:$0xff]
    %v33 = vld [vmem:[%s1 + $0x8] sm:$0xff]
    %v34 = vld [vmem:[%s1 + $0x10] sm:$0xff]
    %v35 = vld [vmem:[%s1 + $0x18] sm:$0xff]
    %vm36 = vcmask 261120
    %v38 = vsel %vm36, %v31, 0
    %40 = vmatpush.msra.mxu0 0.0
    %41 = vmatpush.msra.mxu0 0.0
    %42 = vmatpush.msra.mxu0 0.0
    %43 = vmatpush.msra.mxu0 0.0
    %44 = vmatpush.msra.mxu0 0.0
    %45 = vmatpush.msra.mxu0 0.0
    %46 = vmatpush.msra.mxu0 0.0
    %47 = vmatpush.msra.mxu0 0.0
    %48 = vmatpush.msra.mxu0 0.0
    %49 = vmatpush.msra.mxu0 0.0
    %50 = vmatpush.msra.mxu0 0.0
    %51 = vmatpush.msra.mxu0 0.0
    %52 = vmatpush.msra.mxu0 %v35
    %53 = vmatpush.msra.mxu0 %v34
    %54 = vmatpush.msra.mxu0 %v33
    %55 = vmatpush.msra.mxu0 %v32
    %56 = vmatmul.f32.gmra.mxu0 %v38
    %v57 = vpop.f32.mrf.mxu0
    %v58 = vadd.f32 0.0, %v57
    %59 = vdwg.mxu0
    %v60 = vld [vmem:[%s3] sm:$0x1]
    %v61 = vld [vmem:[%s5] sm:$0x1]
    %v63 = vperm.slane %v61, 0
    %v65 = vsub.f32 %v63, %v58
    %v66 = vld [vmem:[%s2] sm:$0xff]
    %67 = vset.pattern.permute.xlu0 0
    %68 = vperm.xlu0 %67, %v66
    %v69 = vpop.permute.xlu0 %68
    %v70 = vperm.slane %v60, 0
    %vm71 = vcmp.eq.s32.totalorder %v69, %v70
    %v72 = vsel %vm71, %v65, -inf
    %v73 = vsel %vm71, inf, %v65
    %v74 = vld [vmem:[#allocation2] sm:$0xff]
    %v75 = vld [vmem:[#allocation3] sm:$0xff]
    %v76 = vmax.f32 %v74, %v72
    %v77 = vmin.f32 %v75, %v73
    %vm78 = vcmask 64512
    %79 = vst.msk [vmem:[#allocation2] sm:$0xff] %vm78, %v76
    %80 = vst.msk [vmem:[#allocation3] sm:$0xff] %vm78, %v77
    // Predicated region
    $region30: #{tpu_custom_call.1} parent=1 // pred_check
      %p81 = pneg %p24
    $region31: #{tpu_custom_call.1} parent=1 // pred_check_branch
      %83 = sbr.rel (%p81) target = $region33
    $region32: #{tpu_custom_call.1} parent=1 // pred_region
      %v84 = vld [vmem:[%s4] sm:$0xff]
      %v85 = vld [vmem:[#allocation2] sm:$0xff]
      %v86 = vsel %vm78, %v85, -inf
      %87 = vmax.xlane.f32.xlu0 %v86
      %v88 = vpop.xlane.xlu0 %87
      %v89 = vmul.f32 %v88, 2.0
      %v90 = vadd.f32 %v89, %v84
      %v91 = vld [vmem:[#allocation3] sm:$0xff]
      %v92 = vsel %vm78, %v91, inf
      %93 = vmin.xlane.f32.xlu0 %v92
      %v94 = vpop.xlane.xlu0 %93
      %v95 = vmul.f32 %v94, 2.0
      %v96 = vadd.f32 %v95, %v84
      %v97 = vmax.f32 %v90, 1e-12
      %v98 = vrsqrt.pop %v97
      %v99 = vmul.f32 %v98, %v97
      %v100 = vmul.f32 %v99, %v98
      %v101 = vmul.f32 0.5, %v100
      %v102 = vsub.f32 1.5, %v101
      %v103 = vmul.f32 %v98, %v102
      %v104 = vmul.f32 %v97, %v103
      %vm105 = vcmp.eq.f32.partialorder %v97, inf
      %v106 = vsel %vm105, %v97, %v104
      %vm107 = vcmp.eq.f32.partialorder %v97, 0.0
      %v108 = vand.u32 %v97, 2147483648
      %v109 = vsel %vm107, %v108, %v106
      %v110 = vmax.f32 %v96, 1e-12
      %v111 = vrsqrt.pop %v110
      %v112 = vmul.f32 %v111, %v110
      %v113 = vmul.f32 %v112, %v111
      %v114 = vmul.f32 0.5, %v113
      %v115 = vsub.f32 1.5, %v114
      %v116 = vmul.f32 %v111, %v115
      %v117 = vmul.f32 %v110, %v116
      %vm118 = vcmp.eq.f32.partialorder %v110, inf
      %v119 = vsel %vm118, %v110, %v117
      %vm120 = vcmp.eq.f32.partialorder %v110, 0.0
      %v121 = vand.u32 %v110, 2147483648
      %v122 = vsel %vm120, %v121, %v119
      %s123 = smul.u32 0, 8
      %v124 = vlaneseq
      %v125 = vshrl.u32 %v124, 7
      %v126 = vstv %s123
      %v127 = vadd.s32 %v126, %v125
      %vm128 = vcmp.lt.s32.totalorder %v127, 8
      %v129 = vsel %vm128, 1, 0
      %v130 = vcvt.s32.f32 %v129
      %v131 = vmul.f32 %v130, %v109
      %vm132 = vcmask 7168
      %v133 = vsel %vm132, %v131, 0.0
      %134 = vadd.xlane.f32.xlu0 %v133
      %v135 = vpop.xlane.xlu0 %134
      %v136 = vrot.slane %v135, 4
      %v137 = vadd.f32 %v135, %v136
      %v138 = vrot.slane %v137, 2
      %v139 = vadd.f32 %v137, %v138
      %v140 = vrot.slane %v139, 1
      %v141 = vadd.f32 %v139, %v140
      %s142 = vtos %v141
      %v143 = vsub.f32 0.0, %v122
      %v144 = vmax.f32 %v143, 0.0
      %v145 = vmul.f32 %v130, %v144
      %v146 = vsel %vm132, %v145, 0.0
      %147 = vadd.xlane.f32.xlu0 %v146
      %v148 = vpop.xlane.xlu0 %147
      %v149 = vrot.slane %v148, 4
      %v150 = vadd.f32 %v148, %v149
      %v151 = vrot.slane %v150, 2
      %v152 = vadd.f32 %v150, %v151
      %v153 = vrot.slane %v152, 1
      %v154 = vadd.f32 %v152, %v153
      %s155 = vtos %v154
      %vm156 = vcmp.lt.f32.partialorder %v109, 0.0
      %v157 = vsel %vm156, 1, 0
      %v158 = vcvt.s32.f32 %v157
      %vm159 = vcmp.ge.f32.partialorder %v122, 0.0
      %v160 = vsel %vm159, 1, 0
      %v161 = vcvt.s32.f32 %v160
      %v162 = vadd.f32 %v158, %v161
      %v163 = vmul.f32 %v130, %v162
      %v164 = vsel %vm132, %v163, 0.0
      %165 = vadd.xlane.f32.xlu0 %v164
      %v166 = vpop.xlane.xlu0 %165
      %v167 = vrot.slane %v166, 4
      %v168 = vadd.f32 %v166, %v167
      %v169 = vrot.slane %v168, 2
      %v170 = vadd.f32 %v168, %v169
      %v171 = vrot.slane %v170, 1
      %v172 = vadd.f32 %v170, %v171
      %s173 = vtos %v172
      %v174 = vlaneseq
      %v175 = vand.u32 %v174, 127
      %vm176 = vcmp.eq.s32.totalorder %v175, 0
      %vm177 = vcmp.eq.s32.totalorder %v175, 1
      %vm178 = vcmp.eq.s32.totalorder %v175, 2
      %v179 = vstv %s173
      %v180 = vsel %vm178, %v179, 0.0
      %v181 = vstv %s155
      %v182 = vsel %vm177, %v181, %v180
      %v183 = vstv %s142
      %v184 = vsel %vm176, %v183, %v182
      %185 = vst [vmem:[#allocation4] sm:$0xff] %v184
    $region33: #{tpu_custom_call.1} parent=1 // pred_fallthru
      _
    // Predicated region
    $region34: #{tpu_custom_call.1} parent=1 // pred_check
      _
    $region35: #{tpu_custom_call.1} parent=1 // pred_check_branch
      %187 = sbr.rel (0) target = $region37
    $region36: #{tpu_custom_call.1} parent=1 // pred_region
      %189 = vsyncadd [#allocation5], 0
      %s191 = sshll.u32 [#allocation4], 4
      %s192 = int_to_ptr.vmem [resolvable:$true] %s191
      %s193 = sshll.u32 %s6, 4
      %s194 = int_to_ptr.hbm [resolvable:$true] %s193
      %196 = dma.vmem_to_hbm [thread:$0]  %s192, 128, %s194, [#allocation5]
    $region37: #{tpu_custom_call.1} parent=1 // pred_fallthru
      _
    // Predicated region
    $region38: #{tpu_custom_call.1} parent=1 // pred_check
      _
    $region39: #{tpu_custom_call.1} parent=1 // pred_check_branch
      %198 = sbr.rel (0) target = $region41
    $region40: #{tpu_custom_call.1} parent=1 // pred_region
      %200 = dma.done [#allocation5], 128
    $region41: #{tpu_custom_call.1} parent=1 // pred_fallthru
      _
    %201 = vsyncpa [#allocation5], 1

</llo_original>
